<compile_context>
chip_gen: v6e
topology: v6e:2x2x1
jax: 0.10.0
libtpu: 0.0.40
codegen_flags: <defaults>
</compile_context>

<pallas_src>
import functools

import jax
import jax.numpy as jnp
from jax.experimental import pallas as pl
from jax.experimental.pallas import tpu as pltpu


def _round_up(x, m):
    return (x + m - 1) // m * m


def _vmem_capacity_bytes():
    try:
        return int(pltpu.get_tpu_info().vmem_capacity_bytes)
    except Exception:
        # Unknown chip / interpret mode: assume the smallest (v7x, 64 MiB/TC).
        return 64 * 1024 * 1024


def _fused_linear_kernel(x_ref, w_ref, b_ref, o_ref):
    # x: (TB, D), w: (D, TN)  [bf16/f32]; b: (1, TN) f32 -> o: (TB, TN)
    acc = jnp.dot(x_ref[...], w_ref[...], preferred_element_type=jnp.float32)
    o_ref[...] = (acc + b_ref[...].astype(jnp.float32)).astype(o_ref.dtype)


@functools.partial(
    jax.jit, static_argnames=("block_b", "block_n", "vmem_limit", "out_dtype"))
def fused_linear(x, w_cat, b_cat, *, block_b, block_n, vmem_limit, out_dtype):
    """x [B, D] @ w_cat [D, N_pad] + b_cat [1, N_pad] -> [B, N_pad] (out_dtype).

    block_n must divide N_pad (guaranteed by AllClassifiers.__init__), so no
    weight re-padding ever happens inside the jit, and the batch axis is not
    padded either (pl.cdiv grid; the last batch block may be ragged).
    """
    B, D = x.shape
    D2, n_pad = w_cat.shape
    assert D == D2, (D, D2)
    tn = int(block_n)
    assert n_pad % tn == 0 and tn % 128 == 0, (n_pad, tn)

    # Batch tile: full-MXU multiples of 128 when the batch allows it (avoids
    # partially-filled MXU passes / masked stores on v5e), else one
    # sublane-aligned tile covering the whole small batch.
    if B >= 128:
        tb = max(128, min(int(block_b), _round_up(B, 128)) // 128 * 128)
    else:
        tb = _round_up(B, 8)

    grid = (n_pad // tn, pl.cdiv(B, tb))  # class OUTER, batch inner (fastest)
    grid_n = grid[0]
    out_dt = jnp.dtype(out_dtype)

    cost = pl.CostEstimate(
        flops=2 * B * D * n_pad,
        transcendentals=0,
        bytes_accessed=(D * n_pad * w_cat.dtype.itemsize        # W read once
                        + grid_n * B * D * x.dtype.itemsize     # x per class slab
                        + n_pad * b_cat.dtype.itemsize          # bias once
                        + B * n_pad * out_dt.itemsize),         # output once
    )

    return pl.pallas_call(
        _fused_linear_kernel,
        out_shape=jax.ShapeDtypeStruct((B, n_pad), out_dt),
        grid_spec=pl.GridSpec(
            grid=grid,
            in_specs=[
                # x: depends only on the inner batch axis -> streamed.
                pl.BlockSpec((tb, D), lambda j, i: (i, 0)),
                # W slab: depends only on the outer class axis -> stays
                # VMEM-resident across the whole inner batch loop (read once).
                pl.BlockSpec((D, tn), lambda j, i: (0, j)),
                # Bias row: resident alongside its W slab.
                pl.BlockSpec((1, tn), lambda j, i: (0, j)),
            ],
            out_specs=pl.BlockSpec((tb, tn), lambda j, i: (i, j)),
        ),
        compiler_params=pltpu.CompilerParams(
            # Only the class axis is parallel: on v7x each TensorCore owns a
            # disjoint weight slab (2x effective weight bandwidth); batch is a
            # plain inner loop.
            dimension_semantics=("parallel", "arbitrary"),
            vmem_limit_bytes=int(vmem_limit),
        ),
        cost_estimate=cost,
    )(x, w_cat, b_cat)


class AllClassifiers:
    """JAX/Pallas port of dinov2 AllClassifiers (all heads fused in one kernel).

    params_dict: {name: (weight [D, N_head], bias [N_head])}
    __call__(inputs [B, D]) -> {name: logits [B, N_head]} (out_dtype)
    """

    def __init__(self, params_dict, *, compute_dtype=jnp.bfloat16,
                 out_dtype=jnp.float32, block_b=None, block_n=None):
        if not params_dict:
            raise ValueError("empty classifier dict")
        self.names = list(params_dict.keys())
        self.compute_dtype = jnp.dtype(compute_dtype)
        self.out_dtype = jnp.dtype(out_dtype)

        d = int(params_dict[self.names[0]][0].shape[0])
        self.in_dim = d

        self.sizes, self.offsets = [], []
        ws, bs = [], []
        off = 0
        for k in self.names:
            w, b = params_dict[k]
            w = jnp.asarray(w, jnp.float32)
            b = jnp.asarray(b, jnp.float32)
            assert w.shape[0] == d and b.shape == (w.shape[1],), k
            n = int(w.shape[1])
            self.sizes.append(n)
            self.offsets.append(off)
            off += n
            ws.append(w)
            bs.append(b)
        self.total_classes = off

        # ---- Generation-aware tile / VMEM selection ------------------------
        capacity = _vmem_capacity_bytes()
        budget = int(capacity * 0.75)        # leave Mosaic scratch headroom
        if block_n is None:                  # 128 MiB chips (v5e/v6e): bigger slabs
            block_n = 1024 if capacity >= 100 * (1 << 20) else 512
        if block_b is None:
            block_b = 256
        tn = max(128, int(block_n) // 128 * 128)
        tb = max(8, int(block_b) // 8 * 8)

        n128 = _round_up(off, 128)
        tn = min(tn, n128)

        w_bytes = self.compute_dtype.itemsize
        out_bytes = self.out_dtype.itemsize

        def vmem_est(tb_, tn_):
            # double-buffered x tile + W slab + bias row + output tile
            return 2 * (tb_ * d * w_bytes + d * tn_ * w_bytes
                        + tn_ * 4 + tb_ * tn_ * out_bytes)

        # Shrink the class tile (then the batch tile) until the working set
        # fits the budget: decouples VMEM from D without re-streaming W.
        while tn > 128 and vmem_est(tb, tn) > budget:
            tn -= 128
        while tb > 128 and vmem_est(tb, tn) > budget:
            tb -= 128
        self.block_n = int(tn)
        self.block_b = int(tb)
        self.vmem_limit = int(budget)

        # ---- Fused, lane-dense weight slab (padded ONCE, never in the jit) --
        n_pad = _round_up(n128, tn)
        w_cat = jnp.concatenate(ws, axis=1)
        b_cat = jnp.concatenate(bs)[None, :]
        if n_pad != off:
            w_cat = jnp.pad(w_cat, ((0, 0), (0, n_pad - off)))
            b_cat = jnp.pad(b_cat, ((0, 0), (0, n_pad - off)))
        self.w_cat = w_cat.astype(self.compute_dtype)  # bf16: half the HBM bytes
        self.b_cat = b_cat                              # bias stays f32

    def __call__(self, inputs):
        x = jnp.asarray(inputs).astype(self.compute_dtype)
        out = fused_linear(x, self.w_cat, self.b_cat,
                           block_b=self.block_b, block_n=self.block_n,
                           vmem_limit=self.vmem_limit, out_dtype=self.out_dtype)
        # Static slices per head: free (no extra kernels / data movement).
        # Padded class columns have zero weights/bias, so no leakage.
        return {k: out[:, o:o + n]
                for k, o, n in zip(self.names, self.offsets, self.sizes)}

    def __len__(self):
        return len(self.names)


def _make_linear_params(key, in_dim, num_classes):
    kw, kb = jax.random.split(key)
    bound = 1.0 / jnp.sqrt(in_dim)
    w = jax.random.uniform(kw, (in_dim, num_classes), jnp.float32, -bound, bound)
    b = jax.random.uniform(kb, (num_classes,), jnp.float32, -bound, bound)
    return w, b


if __name__ == "__main__":
    key = jax.random.PRNGKey(0)
    B, D = 8, 32  # batch, feature dim (small demo shapes)

    k_x, k1, k2, k3 = jax.random.split(key, 4)
    x = jax.random.normal(k_x, (B, D), jnp.float32)

    # Three linear heads with different class counts, like dinov2's
    # multi-head linear-probe sweep.
    params = {
        "classifier_lr_0_0100_blocks_1": _make_linear_params(k1, D, 16),
        "classifier_lr_0_0100_blocks_4": _make_linear_params(k2, D, 32),
        "classifier_lr_0_1000_blocks_1": _make_linear_params(k3, D, 8),
    }

    model = AllClassifiers(params)  # f32 logits (nn.Linear parity)
    outputs = model(x)
    jax.block_until_ready(outputs)

    # Correctness: compare against a reference using the same bf16 cast of
    # inputs/weights (tight), and against exact f32 nn.Linear semantics (loose;
    # pass compute_dtype=jnp.float32 if exact parity is required).
    x_bf = x.astype(jnp.bfloat16).astype(jnp.float32)
    for name, (w, b) in params.items():
        got = outputs[name]
        w_bf = w.astype(jnp.bfloat16).astype(jnp.float32)
        ref_bf = x_bf @ w_bf + b
        ref_f32 = x @ w + b
        assert got.shape == ref_f32.shape, (name, got.shape, ref_f32.shape)
        assert got.dtype == jnp.float32, (name, got.dtype)
        assert jnp.allclose(got, ref_bf, atol=2e-3, rtol=2e-3), name
        assert jnp.allclose(got, ref_f32, atol=5e-2, rtol=5e-2), name

    # Optional bf16-logits path (halves output HBM writes; same argmax).
    model_bf16 = AllClassifiers(params, out_dtype=jnp.bfloat16)
    outputs_bf16 = model_bf16(x)
    jax.block_until_ready(outputs_bf16)
    for name in params:
        got16 = outputs_bf16[name]
        assert got16.dtype == jnp.bfloat16, (name, got16.dtype)
        assert jnp.allclose(got16.astype(jnp.float32), outputs[name],
                            atol=3e-2, rtol=3e-2), name

    assert len(model) == 3
    print("KERNEL_OK")
</pallas_src>

<mosaic_0001>
module attributes {stable_mosaic.version = 11 : i64} {
  func.func @_fused_linear_kernel(%arg0: i32, %arg1: i32, %arg2: memref<8x32xbf16, #tpu.memory_space<vmem>>, %arg3: memref<32x128xbf16, #tpu.memory_space<vmem>>, %arg4: memref<1x128xf32, #tpu.memory_space<vmem>>, %arg5: memref<8x128xf32, #tpu.memory_space<vmem>>) attributes {dimension_semantics = [#tpu.dimension_semantics<parallel>, #tpu.dimension_semantics<arbitrary>], iteration_bounds = array<i64: 1, 1>, scalar_prefetch = 0 : i64, scratch_operands = 0 : i64, tpu.core_type = #tpu.core_type<tc>, window_params = [{transform_indices = @transform_0, window_bounds = array<i64: 8, 32>}, {transform_indices = @transform_1, window_bounds = array<i64: 32, 128>}, {transform_indices = @transform_2, window_bounds = array<i64: 1, 128>}, {transform_indices = @transform_3, window_bounds = array<i64: 8, 128>}]} {
    %c0 = arith.constant 0 : index
    %c0_0 = arith.constant 0 : index
    %0 = vector.load %arg2[%c0, %c0_0] : memref<8x32xbf16, #tpu.memory_space<vmem>>, vector<8x32xbf16>
    %c0_1 = arith.constant 0 : index
    %c0_2 = arith.constant 0 : index
    %1 = vector.load %arg3[%c0_1, %c0_2] : memref<32x128xbf16, #tpu.memory_space<vmem>>, vector<32x128xbf16>
    %cst = arith.constant dense<0.000000e+00> : vector<8x128xf32>
    %2 = tpu.matmul %0, %1, %cst {dimension_numbers = #tpu.dot_dimension_numbers<[1], [0], [0], [1], [0, 0, 1, 1], [], []>} : vector<8x32xbf16>, vector<32x128xbf16>, vector<8x128xf32> -> vector<8x128xf32>
    %c0_3 = arith.constant 0 : index
    %c0_4 = arith.constant 0 : index
    %3 = vector.load %arg4[%c0_3, %c0_4] : memref<1x128xf32, #tpu.memory_space<vmem>>, vector<1x128xf32>
    %4 = vector.broadcast %3 : vector<1x128xf32> to vector<8x128xf32>
    %5 = arith.addf %2, %4 : vector<8x128xf32>
    %c0_5 = arith.constant 0 : index
    %c0_6 = arith.constant 0 : index
    %6 = vector.load %arg5[%c0_5, %c0_6] : memref<8x128xf32, #tpu.memory_space<vmem>>, vector<8x128xf32>
    tpu.vector_store %arg5[%c0_5, %c0_6], %5 {strides = array<i32>} : memref<8x128xf32, #tpu.memory_space<vmem>>, vector<8x128xf32>,
    return
  }
  func.func @transform_0(%arg0: i32, %arg1: i32) -> (i32, i32) {
    %c0_i32 = arith.constant 0 : i32
    %c0_i32_0 = arith.constant 0 : i32
    return %arg1, %c0_i32 : i32, i32
  }
  func.func @transform_1(%arg0: i32, %arg1: i32) -> (i32, i32) {
    %c0_i32 = arith.constant 0 : i32
    %c0_i32_0 = arith.constant 0 : i32
    return %c0_i32, %arg0 : i32, i32
  }
  func.func @transform_2(%arg0: i32, %arg1: i32) -> (i32, i32) {
    %c0_i32 = arith.constant 0 : i32
    %c0_i32_0 = arith.constant 0 : i32
    return %c0_i32, %arg0 : i32, i32
  }
  func.func @transform_3(%arg0: i32, %arg1: i32) -> (i32, i32) {
    %c0_i32 = arith.constant 0 : i32
    return %arg1, %arg0 : i32, i32
  }
}

</mosaic_0001>

<llo_original>
// kernel: fused_linear.1
$region0: #{fused_linear.1}
  #allocation0 [shape = 'u32[]', space=smem, size = 0x4, offset = 0x4, fixed_abs, tag = 'smem constant byte address 0x4 - core index']
  #allocation1 [shape = 'u32[144,128]{1,0:T(1,128)}', space=vmem, size = 0x12000, scoped, tag = 'internal scratch']
  %s0 = inlined_call_operand.hbm [shape: bf16[8,32], index: 0, kind: input, shape index: {}]
  %s1 = inlined_call_operand.hbm [shape: bf16[32,128], index: 1, kind: input, shape index: {}]
  %s2 = inlined_call_operand.vmem [shape: f32[1,128], index: 2, kind: input, shape index: {}]
  %s3 = inlined_call_operand.hbm [shape: f32[8,128], index: 3, kind: output, shape index: {}]
  %s4 = sld [smem:[#allocation0]]
  $region30: #{fused_linear.1} parent=0
    _
  %s6 = ssub.s32 1, %s4
  %s7 = scalar_select 0, %s6, %s4
  $region1: #{fused_linear.1} parent=0
    #allocation2 [shape = 'u8[2048]{0}', space=vmem, size = 0x800, scoped, tag = 'input window, operand 0, single buffered']
    #allocation3 [shape = 's32[1]{0}', space=sflag, size = 0x4, scoped, tag = 'scoped memory for fused_linear.1']
    #allocation4 [shape = 's32[1]{0}', space=sflag, size = 0x4, scoped, tag = 'scoped memory for fused_linear.1']
    #allocation5 [shape = 'u8[8192]{0}', space=vmem, size = 0x2000, scoped, tag = 'input window, operand 1, single buffered']
    #allocation6 [shape = 's32[1]{0}', space=sflag, size = 0x4, scoped, tag = 'scoped memory for fused_linear.1']
    #allocation7 [shape = 'u8[4096]{0}', space=vmem, size = 0x1000, scoped, tag = 'output window, operand 0, single buffered']
    %8 = vsyncpa [#allocation3], 0
    %9 = vsyncpa [#allocation6], 0
    %10 = vsyncpa [#allocation4], 0
    // Predicated region
    $region2: #{fused_linear.1} parent=1 // pred_check
      _
    $region3: #{fused_linear.1} parent=1 // pred_check_branch
      %12 = sbr.rel (0) target = $region5
    $region4: #{fused_linear.1} parent=1 // pred_region
      %s14 = ssub.s32 64, 64
      %15 = vsyncadd [#allocation3], %s14
      %s17 = sshll.u32 [#allocation2], 4
      %s18 = int_to_ptr.vmem [resolvable:$true] %s17
      %20 = dma.hbm_to_vmem [thread:$0]  %s0, 64, %s18, [#allocation3]
    $region5: #{fused_linear.1} parent=1 // pred_fallthru
      _
    // Predicated region
    $region6: #{fused_linear.1} parent=1 // pred_check
      _
    $region7: #{fused_linear.1} parent=1 // pred_check_branch
      %22 = sbr.rel (0) target = $region9
    $region8: #{fused_linear.1} parent=1 // pred_region
      %s24 = ssub.s32 256, 256
      %25 = vsyncadd [#allocation6], %s24
      %s26 = sshll.u32 [#allocation5], 4
      %s27 = int_to_ptr.vmem [resolvable:$true] %s26
      %32 = dma.hbm_to_vmem [thread:$0]  %s1, 256, %s27, [#allocation6], 64, 64, 4
    $region9: #{fused_linear.1} parent=1 // pred_fallthru
      _
    // Predicated region
    $region10: #{fused_linear.1} parent=1 // pred_check
      _
    $region11: #{fused_linear.1} parent=1 // pred_check_branch
      %34 = sbr.rel (0) target = $region13
    $region12: #{fused_linear.1} parent=1 // pred_region
      _
    $region13: #{fused_linear.1} parent=1 // pred_fallthru
      _
    // Predicated region
    $region14: #{fused_linear.1} parent=1 // pred_check
      _
    $region15: #{fused_linear.1} parent=1 // pred_check_branch
      %36 = sbr.rel (0) target = $region17
    $region16: #{fused_linear.1} parent=1 // pred_region
      %37 = dma.done [#allocation3], 64
    $region17: #{fused_linear.1} parent=1 // pred_fallthru
      _
    // Predicated region
    $region18: #{fused_linear.1} parent=1 // pred_check
      _
    $region19: #{fused_linear.1} parent=1 // pred_check_branch
      %39 = sbr.rel (0) target = $region21
    $region20: #{fused_linear.1} parent=1 // pred_region
      %40 = dma.done [#allocation6], 256
    $region21: #{fused_linear.1} parent=1 // pred_fallthru
      _
    %v42 = vld [vmem:[#allocation2] sm:$0xf]
    %v43 = vld [vmem:[#allocation5] sm:$0xf]
    %v44 = vld [vmem:[#allocation5 + $0x4] sm:$0xf]
    %v45 = vld [vmem:[#allocation5 + $0x8] sm:$0xf]
    %v46 = vld [vmem:[#allocation5 + $0xc] sm:$0xf]
    %v47 = vld [vmem:[%s2] sm:$0x1]
    %v49 = vlaneseq
    %v50 = vshrl.u32 %v49, 7
    %v51 = vsub.s32 0, %v50
    %v52 = vrot.slane %v47, %v51
    %v58 = vunpack.c.l.b16 %v43
    %v59 = vunpack.c.l.b16 %v44
    %v60 = vunpack.c.l.b16 %v45
    %v61 = vunpack.c.l.b16 %v46
    %v62 = vpack.c.b16 %v59, %v58
    %v63 = vpack.c.b16 %v61, %v60
    %vm66 = vcmask 261120
    %v68 = vsel %vm66, %v42, 0
    %70 = vmatprep.subr.bf16.mxu0 0
    %71 = vmatpush1.bf16.msra.mxu0 0
    %72 = vmatprep.subr.bf16.mxu0 0
    %73 = vmatpush1.bf16.msra.mxu0 0
    %74 = vmatprep.subr.bf16.mxu0 0
    %75 = vmatpush1.bf16.msra.mxu0 0
    %76 = vmatprep.subr.bf16.mxu0 0
    %77 = vmatpush1.bf16.msra.mxu0 0
    %78 = vmatprep.subr.bf16.mxu0 0
    %79 = vmatpush1.bf16.msra.mxu0 0
    %80 = vmatprep.subr.bf16.mxu0 0
    %81 = vmatpush1.bf16.msra.mxu0 0
    %82 = vmatprep.subr.bf16.mxu0 0
    %83 = vmatpush1.bf16.msra.mxu0 %v63
    %84 = vmatprep.subr.bf16.mxu0 0
    %85 = vmatpush1.bf16.msra.mxu0 %v62
    %86 = vmatprep.subr.bf16.mxu0 0
    %87 = vmatpush2.bf16.msra.mxu0 0
    %88 = vmatprep.subr.bf16.mxu0 0
    %89 = vmatpush2.bf16.msra.mxu0 0
    %90 = vmatprep.subr.bf16.mxu0 0
    %91 = vmatpush2.bf16.msra.mxu0 0
    %92 = vmatprep.subr.bf16.mxu0 0
    %93 = vmatpush2.bf16.msra.mxu0 0
    %94 = vmatprep.subr.bf16.mxu0 0
    %95 = vmatpush2.bf16.msra.mxu0 0
    %96 = vmatprep.subr.bf16.mxu0 0
    %97 = vmatpush2.bf16.msra.mxu0 0
    %98 = vmatprep.subr.bf16.mxu0 0
    %99 = vmatpush2.bf16.msra.mxu0 0
    %100 = vmatprep.subr.bf16.mxu0 0
    %101 = vmatpush2.bf16.msra.mxu0 0
    %102 = vmatprep.mubr.bf16.mxu0 0
    %103 = vmatmul.mubr.bf16.gmra.mxu0 %v68
    %v104 = vpop.f32.mrf.mxu0
    %v105 = vadd.f32 %v52, %v104
    %v106 = vpop.f32.mrf.mxu0
    %v107 = vpop.f32.mrf.mxu0
    %v108 = vpop.f32.mrf.mxu0
    %109 = vdwg.mxu0
    %110 = vst [vmem:[#allocation7] sm:$0xff] %v105
    // Predicated region
    $region22: #{fused_linear.1} parent=1 // pred_check
      _
    $region23: #{fused_linear.1} parent=1 // pred_check_branch
      %112 = sbr.rel (0) target = $region25
    $region24: #{fused_linear.1} parent=1 // pred_region
      %s114 = ssub.s32 128, 128
      %115 = vsyncadd [#allocation4], %s114
      %s117 = sshll.u32 [#allocation7], 4
      %s118 = int_to_ptr.vmem [resolvable:$true] %s117
      %120 = dma.vmem_to_hbm [thread:$0]  %s118, 128, %s3, [#allocation4]
    $region25: #{fused_linear.1} parent=1 // pred_fallthru
      _
    // Predicated region
    $region26: #{fused_linear.1} parent=1 // pred_check
      _
    $region27: #{fused_linear.1} parent=1 // pred_check_branch
      %122 = sbr.rel (0) target = $region29
    $region28: #{fused_linear.1} parent=1 // pred_region
      %123 = dma.done [#allocation4], 128
    $region29: #{fused_linear.1} parent=1 // pred_fallthru
      _
    %124 = vsyncpa [#allocation3], 1
    %125 = vsyncpa [#allocation6], 1
    %126 = vsyncpa [#allocation4], 1

</llo_original>
